<compile_context>
chip_gen: v7x
topology: tpu7x:2x2x1
jax: 0.10.0
libtpu: 0.0.40
codegen_flags: <defaults>
</compile_context>

<pallas_src>
import jax
import jax.numpy as jnp
from jax.experimental import pallas as pl
from jax.experimental.pallas import tpu as pltpu

LANE = 128


def _round_up(n, m):
    return ((n + m - 1) // m) * m


def discriminator_kernel(x_ref, w1_ref, b1_ref, w2_ref, b2_ref, w3_ref, b3_ref, o_ref):
    # x streamed as f32; bf16 cast done here (free VPU work under the MXU),
    # avoiding a separate pad/cast HBM pass in the wrapper.
    x = x_ref[...].astype(jnp.bfloat16)                                   # (TB, D)

    # Layer 1: bf16 MXU matmul, f32 accumulate; bias + LeakyReLU in f32
    # (f32 elementwise is required on v5e's VPU anyway).
    h1 = jnp.dot(x, w1_ref[...], preferred_element_type=jnp.float32) + b1_ref[...]
    h1 = jnp.maximum(h1, 0.2 * h1)                                        # LeakyReLU(0.2)

    # Layer 2: bf16 MXU matmul, f32 accumulate.
    h2 = jnp.dot(h1.astype(jnp.bfloat16), w2_ref[...],
                 preferred_element_type=jnp.float32) + b2_ref[...]
    h2 = jnp.maximum(h2, 0.2 * h2)

    # Layer 3: matmul against w3 padded to (H2p, LANE) (only column 0 real) so the
    # output tile is lane-dense -> unmasked stores.  b3 comes in via SMEM.
    out = jnp.dot(h2.astype(jnp.bfloat16), w3_ref[...],
                  preferred_element_type=jnp.float32) + b3_ref[0]
    o_ref[...] = out.astype(o_ref.dtype)


def init_params(key, input_dim, dtype=jnp.float32):
    """PyTorch nn.Linear-style init (U[-1/sqrt(fan_in), 1/sqrt(fan_in)]), plain f32 shapes."""
    h1 = 2 * input_dim // 3
    h2 = input_dim // 3
    dims = [(input_dim, h1), (h1, h2), (h2, 1)]
    params = []
    for i, (fan_in, fan_out) in enumerate(dims):
        kw, kb = jax.random.split(jax.random.fold_in(key, i))
        bound = 1.0 / (fan_in ** 0.5)
        w = jax.random.uniform(kw, (fan_in, fan_out), dtype, -bound, bound)
        b = jax.random.uniform(kb, (fan_out,), dtype, -bound, bound)
        params += [w, b]
    return tuple(params)


def pack_params(params):
    """One-time padding of hidden dims to lane multiples + bf16 cast of MXU weights.

    w1 keeps an unpadded K dim (= D) so x can be fed without a feature-pad pass.
    w3 is padded to (H2p, LANE) with only column 0 real -> lane-dense output tile.
    Zero padding is numerically inert (LeakyReLU(0) == 0).
    """
    w1, b1, w2, b2, w3, b3 = params
    D, H1 = w1.shape
    H2 = w2.shape[1]
    H1p, H2p = _round_up(H1, LANE), _round_up(H2, LANE)

    w1p = jnp.pad(w1.astype(jnp.bfloat16), ((0, 0), (0, H1p - H1)))            # (D, H1p)
    b1p = jnp.pad(b1.astype(jnp.float32).reshape(1, H1), ((0, 0), (0, H1p - H1)))
    w2p = jnp.pad(w2.astype(jnp.bfloat16), ((0, H1p - H1), (0, H2p - H2)))     # (H1p, H2p)
    b2p = jnp.pad(b2.astype(jnp.float32).reshape(1, H2), ((0, 0), (0, H2p - H2)))
    w3p = jnp.pad(w3.astype(jnp.bfloat16), ((0, H2p - H2), (0, LANE - 1)))     # (H2p, LANE)
    b3p = b3.astype(jnp.float32).reshape(1,)                                   # SMEM scalar
    return (w1p, b1p, w2p, b2p, w3p, b3p)


def _vmem_cap_bytes():
    """Physical VMEM per TensorCore for the current generation, with a safe fallback."""
    try:
        info = pltpu.get_tpu_info()
        return int(getattr(info, "vmem_capacity_bytes", 64 * 1024 * 1024))
    except Exception:
        return 64 * 1024 * 1024   # conservative (v7x-sized) fallback


def discriminator_forward(x, packed_params, *, tb=512):
    """x: (B, D) float32.  Returns (B, 1) float32 logits."""
    w1p, b1p, w2p, b2p, w3p, b3p = packed_params
    B, D = x.shape
    H1p = w1p.shape[1]
    H2p = w2p.shape[1]

    # Tile selection: multiples of 16 sublanes; largest tile (fewest grid steps) for
    # single-TC chips, but keep >= 2 grid steps so v7x's two TensorCores both get work.
    b_round = _round_up(B, 16)
    tb = min(_round_up(tb, 16), b_round)
    if b_round // tb < 2 and b_round >= 32:
        tb = _round_up(b_round // 2, 16)
    b_pad = _round_up(B, tb)

    # Batch pad only if needed; no feature pad / dtype cast pass over x.
    xp = x if b_pad == B else jnp.pad(x, ((0, b_pad - B), (0, 0)))

    grid = (b_pad // tb,)
    const2 = lambda i: (0, 0)

    # VMEM budget: double-buffered x/out tiles + resident (double-buffered) weights
    # + f32 intermediates, capped by the generation's physical VMEM with headroom.
    weight_bytes = sum(int(p.size) * p.dtype.itemsize
                       for p in (w1p, b1p, w2p, b2p, w3p))
    est = (2 * tb * D * 4                  # x double buffer (f32)
           + 2 * weight_bytes              # resident weights (default double-buffered)
           + tb * (H1p + H2p + LANE) * 4   # f32 intermediates
           + 2 * tb * LANE * 4)            # out double buffer (f32, lane-dense)
    cap = _vmem_cap_bytes()
    vmem_limit = int(min(int(0.75 * cap), max(16 * 1024 * 1024, 2 * est)))

    out = pl.pallas_call(
        discriminator_kernel,
        out_shape=jax.ShapeDtypeStruct((b_pad, LANE), jnp.float32),
        grid=grid,
        in_specs=[
            pl.BlockSpec((tb, D), lambda i: (i, 0)),            # x: batch-tiled, f32
            pl.BlockSpec((D, H1p), const2),                     # w1: resident bf16
            pl.BlockSpec((1, H1p), const2),                     # b1: f32
            pl.BlockSpec((H1p, H2p), const2),                   # w2: resident bf16
            pl.BlockSpec((1, H2p), const2),                     # b2: f32
            pl.BlockSpec((H2p, LANE), const2),                  # w3: padded, lane-dense
            pl.BlockSpec(memory_space=pltpu.MemorySpace.SMEM),  # b3: scalar in SMEM
        ],
        out_specs=pl.BlockSpec((tb, LANE), lambda i: (i, 0)),   # lane-dense output block
        compiler_params=pltpu.CompilerParams(
            dimension_semantics=("parallel",),
            vmem_limit_bytes=vmem_limit,
        ),
    )(xp, w1p, b1p, w2p, b2p, w3p, b3p)

    return out[:B, :1]


def reference_forward_f32(x, params):
    w1, b1, w2, b2, w3, b3 = params
    h1 = jax.nn.leaky_relu(x @ w1 + b1, 0.2)
    h2 = jax.nn.leaky_relu(h1 @ w2 + b2, 0.2)
    return h2 @ w3 + b3


def reference_forward_quantized(x, packed_params):
    """Mirrors the kernel's arithmetic (bf16 MXU operands, f32 accumulation) in plain JAX."""
    w1p, b1p, w2p, b2p, w3p, b3p = packed_params
    xq = x.astype(jnp.bfloat16).astype(jnp.float32)
    h1 = jax.nn.leaky_relu(xq @ w1p.astype(jnp.float32) + b1p, 0.2)
    h2 = jax.nn.leaky_relu(
        h1.astype(jnp.bfloat16).astype(jnp.float32) @ w2p.astype(jnp.float32) + b2p, 0.2)
    out = h2.astype(jnp.bfloat16).astype(jnp.float32) @ w3p.astype(jnp.float32) + b3p
    return out[:, :1]


if __name__ == "__main__":
    key = jax.random.PRNGKey(0)
    batch, input_dim = 256, 48          # h1 = 32, h2 = 16 (hidden dims padded to 128 internally)

    kx, kp = jax.random.split(key)
    x = jax.random.normal(kx, (batch, input_dim), jnp.float32)
    params = init_params(kp, input_dim)
    packed = pack_params(params)

    out = discriminator_forward(x, packed)          # >= 2 batch-grid steps (megacore-friendly)
    out = jax.block_until_ready(out)
    assert out.shape == (batch, 1), out.shape

    # Tight check against a reference mirroring the kernel's bf16/f32 arithmetic.
    ref_q = reference_forward_quantized(x, packed)
    assert jnp.allclose(out, ref_q, atol=2e-3, rtol=2e-3), "mismatch vs quantized reference"

    # Looser check against the full-f32 PyTorch-equivalent forward (bf16 MXU operands).
    ref_f32 = reference_forward_f32(x, params)
    assert jnp.allclose(out, ref_f32, atol=5e-2, rtol=5e-2), "mismatch vs f32 reference"

    print("KERNEL_OK")
</pallas_src>

<mosaic_0001>
module attributes {stable_mosaic.version = 11 : i64} {
  func.func @discriminator_kernel(%arg0: i32, %arg1: memref<128x48xf32, #tpu.memory_space<vmem>>, %arg2: memref<48x128xbf16, #tpu.memory_space<vmem>>, %arg3: memref<1x128xf32, #tpu.memory_space<vmem>>, %arg4: memref<128x128xbf16, #tpu.memory_space<vmem>>, %arg5: memref<1x128xf32, #tpu.memory_space<vmem>>, %arg6: memref<128x128xbf16, #tpu.memory_space<vmem>>, %arg7: memref<1xf32, #tpu.memory_space<smem>>, %arg8: memref<128x128xf32, #tpu.memory_space<vmem>>) attributes {dimension_semantics = [#tpu.dimension_semantics<parallel>], iteration_bounds = array<i64: 2>, scalar_prefetch = 0 : i64, scratch_operands = 0 : i64, tpu.core_type = #tpu.core_type<tc>, window_params = [{transform_indices = @transform_0, window_bounds = array<i64: 128, 48>}, {pipeline_mode = #tpu.pipeline_mode<synchronous>, transform_indices = @transform_1, window_bounds = array<i64: 48, 128>}, {pipeline_mode = #tpu.pipeline_mode<synchronous>, transform_indices = @transform_2, window_bounds = array<i64: 1, 128>}, {pipeline_mode = #tpu.pipeline_mode<synchronous>, transform_indices = @transform_3, window_bounds = array<i64: 128, 128>}, {pipeline_mode = #tpu.pipeline_mode<synchronous>, transform_indices = @transform_4, window_bounds = array<i64: 1, 128>}, {pipeline_mode = #tpu.pipeline_mode<synchronous>, transform_indices = @transform_5, window_bounds = array<i64: 128, 128>}, {transform_indices = @transform_6, window_bounds = array<i64: 1>}, {transform_indices = @transform_7, window_bounds = array<i64: 128, 128>}]} {
    %c0 = arith.constant 0 : index
    %c0_0 = arith.constant 0 : index
    %0 = vector.load %arg1[%c0, %c0_0] : memref<128x48xf32, #tpu.memory_space<vmem>>, vector<128x48xf32>
    %1 = arith.truncf %0 : vector<128x48xf32> to vector<128x48xbf16>
    %c0_1 = arith.constant 0 : index
    %c0_2 = arith.constant 0 : index
    %2 = vector.load %arg2[%c0_1, %c0_2] : memref<48x128xbf16, #tpu.memory_space<vmem>>, vector<48x128xbf16>
    %cst = arith.constant dense<0.000000e+00> : vector<128x128xf32>
    %3 = tpu.matmul %1, %2, %cst {dimension_numbers = #tpu.dot_dimension_numbers<[1], [0], [0], [1], [0, 0, 1, 1], [], []>} : vector<128x48xbf16>, vector<48x128xbf16>, vector<128x128xf32> -> vector<128x128xf32>
    %c0_3 = arith.constant 0 : index
    %c0_4 = arith.constant 0 : index
    %4 = vector.load %arg3[%c0_3, %c0_4] : memref<1x128xf32, #tpu.memory_space<vmem>>, vector<1x128xf32>
    %5 = vector.broadcast %4 : vector<1x128xf32> to vector<128x128xf32>
    %6 = arith.addf %3, %5 : vector<128x128xf32>
    %cst_5 = arith.constant 2.000000e-01 : f32
    %7 = vector.broadcast %cst_5 : f32 to vector<128x128xf32>
    %8 = arith.mulf %7, %6 : vector<128x128xf32>
    %9 = arith.maximumf %6, %8 : vector<128x128xf32>
    %10 = arith.truncf %9 : vector<128x128xf32> to vector<128x128xbf16>
    %c0_6 = arith.constant 0 : index
    %c0_7 = arith.constant 0 : index
    %11 = vector.load %arg4[%c0_6, %c0_7] : memref<128x128xbf16, #tpu.memory_space<vmem>>, vector<128x128xbf16>
    %cst_8 = arith.constant dense<0.000000e+00> : vector<128x128xf32>
    %12 = tpu.matmul %10, %11, %cst_8 {dimension_numbers = #tpu.dot_dimension_numbers<[1], [0], [0], [1], [0, 0, 1, 1], [], []>} : vector<128x128xbf16>, vector<128x128xbf16>, vector<128x128xf32> -> vector<128x128xf32>
    %c0_9 = arith.constant 0 : index
    %c0_10 = arith.constant 0 : index
    %13 = vector.load %arg5[%c0_9, %c0_10] : memref<1x128xf32, #tpu.memory_space<vmem>>, vector<1x128xf32>
    %14 = vector.broadcast %13 : vector<1x128xf32> to vector<128x128xf32>
    %15 = arith.addf %12, %14 : vector<128x128xf32>
    %cst_11 = arith.constant 2.000000e-01 : f32
    %16 = vector.broadcast %cst_11 : f32 to vector<128x128xf32>
    %17 = arith.mulf %16, %15 : vector<128x128xf32>
    %18 = arith.maximumf %15, %17 : vector<128x128xf32>
    %19 = arith.truncf %18 : vector<128x128xf32> to vector<128x128xbf16>
    %c0_12 = arith.constant 0 : index
    %c0_13 = arith.constant 0 : index
    %20 = vector.load %arg6[%c0_12, %c0_13] : memref<128x128xbf16, #tpu.memory_space<vmem>>, vector<128x128xbf16>
    %cst_14 = arith.constant dense<0.000000e+00> : vector<128x128xf32>
    %21 = tpu.matmul %19, %20, %cst_14 {dimension_numbers = #tpu.dot_dimension_numbers<[1], [0], [0], [1], [0, 0, 1, 1], [], []>} : vector<128x128xbf16>, vector<128x128xbf16>, vector<128x128xf32> -> vector<128x128xf32>
    %c0_15 = arith.constant 0 : index
    %22 = memref.load %arg7[%c0_15] : memref<1xf32, #tpu.memory_space<smem>>
    %23 = vector.broadcast %22 : f32 to vector<128x128xf32>
    %24 = arith.addf %21, %23 : vector<128x128xf32>
    %c0_16 = arith.constant 0 : index
    %c0_17 = arith.constant 0 : index
    %25 = vector.load %arg8[%c0_16, %c0_17] : memref<128x128xf32, #tpu.memory_space<vmem>>, vector<128x128xf32>
    tpu.vector_store %arg8[%c0_16, %c0_17], %24 {strides = array<i32>} : memref<128x128xf32, #tpu.memory_space<vmem>>, vector<128x128xf32>,
    return
  }
  func.func @transform_0(%arg0: i32) -> (i32, i32) {
    %c0_i32 = arith.constant 0 : i32
    %c0_i32_0 = arith.constant 0 : i32
    return %arg0, %c0_i32 : i32, i32
  }
  func.func @transform_1(%arg0: i32) -> (i32, i32) {
    %c0_i32 = arith.constant 0 : i32
    %c0_i32_0 = arith.constant 0 : i32
    %c0_i32_1 = arith.constant 0 : i32
    return %c0_i32, %c0_i32_0 : i32, i32
  }
  func.func @transform_2(%arg0: i32) -> (i32, i32) {
    %c0_i32 = arith.constant 0 : i32
    %c0_i32_0 = arith.constant 0 : i32
    %c0_i32_1 = arith.constant 0 : i32
    return %c0_i32, %c0_i32_0 : i32, i32
  }
  func.func @transform_3(%arg0: i32) -> (i32, i32) {
    %c0_i32 = arith.constant 0 : i32
    %c0_i32_0 = arith.constant 0 : i32
    %c0_i32_1 = arith.constant 0 : i32
    return %c0_i32, %c0_i32_0 : i32, i32
  }
  func.func @transform_4(%arg0: i32) -> (i32, i32) {
    %c0_i32 = arith.constant 0 : i32
    %c0_i32_0 = arith.constant 0 : i32
    %c0_i32_1 = arith.constant 0 : i32
    return %c0_i32, %c0_i32_0 : i32, i32
  }
  func.func @transform_5(%arg0: i32) -> (i32, i32) {
    %c0_i32 = arith.constant 0 : i32
    %c0_i32_0 = arith.constant 0 : i32
    %c0_i32_1 = arith.constant 0 : i32
    return %c0_i32, %c0_i32_0 : i32, i32
  }
  func.func @transform_6(%arg0: i32) -> i32 {
    %c0_i32 = arith.constant 0 : i32
    %c0_i32_0 = arith.constant 0 : i32
    return %c0_i32 : i32
  }
  func.func @transform_7(%arg0: i32) -> (i32, i32) {
    %c0_i32 = arith.constant 0 : i32
    %c0_i32_0 = arith.constant 0 : i32
    return %arg0, %c0_i32 : i32, i32
  }
}

</mosaic_0001>

<llo_original>
// kernel: tpu_custom_call.1
$region0: #{tpu_custom_call.1}
  #allocation0 [shape = 'u32[]', space=smem, size = 0x4, offset = 0x4, fixed_abs, tag = 'smem constant byte address 0x4 - core index']
  #allocation1 [shape = 'u32[144,128]{1,0:T(1,128)}', space=vmem, size = 0x12000, scoped, tag = 'internal scratch']
  #allocation2 [shape = 'f32[1]{0:T(128)S(6)}', space=smem, size = 0x200, scoped, tag = 'scoped memory for tpu_custom_call.1']
  %s0 = inlined_call_operand.vmem [shape: f32[256,48], index: 0, kind: input, shape index: {}]
  %s1 = inlined_call_operand.vmem [shape: bf16[48,128], index: 1, kind: input, shape index: {}]
  %s2 = inlined_call_operand.vmem [shape: f32[1,128], index: 2, kind: input, shape index: {}]
  %s3 = inlined_call_operand.vmem [shape: bf16[128,128], index: 3, kind: input, shape index: {}]
  %s4 = inlined_call_operand.vmem [shape: f32[1,128], index: 4, kind: input, shape index: {}]
  %s5 = inlined_call_operand.vmem [shape: bf16[128,128], index: 5, kind: input, shape index: {}]
  %s6 = inlined_call_operand.<no memory space> [shape: f32[1], index: 6, kind: input, shape index: {}]
  %s7 = inlined_call_operand.hbm [shape: f32[256,128], index: 7, kind: output, shape index: {}]
  %s8 = sld [smem:[#allocation0]]
  $region61: #{tpu_custom_call.1} parent=0
    _
  %s10 = ssub.s32 1, %s8
  %s11 = scalar_select 0, %s10, %s8
  %12 = sst [smem:[#allocation2]] %s6
  $region1: #{tpu_custom_call.1} parent=0
    #allocation3 [shape = 'u8[131072]{0}', space=vmem, size = 0x20000, scoped, tag = 'output window, operand 0']
    #allocation4 [shape = 's32[2]{0}', space=sflag, size = 0x8, scoped, tag = 'scoped memory for tpu_custom_call.1']
    %13 = vsyncpa [#allocation4], 0
    %s14 = scalar_lea.sflag [#allocation4], 1
    %15 = vsyncpa %s14, 0
    loop: start=0, step=1, limit=4
    $region2: #{tpu_custom_call.1} parent=1 // loop_pre_header
      _
    $region3: #{tpu_custom_call.1} parent=1 // loop_header
      %s17 = sphi 0, %s21
      %p18 = scmp.ge.s32.totalorder %s17, 4
      %s27 = sphi 0, %s29
      %s30 = sphi 0, %s27
      %s31 = sphi 0, %s30
      %s47 = sphi 0, %s31
      %s51 = sphi 0, %s51
      %s53 = sphi 0, %s51
      %s54 = sphi 0, %s53
      %s68 = sphi 0, %s54
      %s72 = sphi 0, %s72
      %s74 = sphi 0, %s72
      %s75 = sphi 0, %s74
      %s89 = sphi 0, %s75
      %s93 = sphi 0, %s93
      %s95 = sphi 0, %s93
      %s96 = sphi 0, %s95
      %s110 = sphi 0, %s96
      %s114 = sphi 0, %s114
      %s116 = sphi 0, %s114
      %s117 = sphi 0, %s116
      %s131 = sphi 0, %s117
      %s135 = sphi 0, %s135
      %s137 = sphi 0, %s135
      %s138 = sphi 0, %s137
      %s152 = sphi 0, %s138
      %s156 = sphi 0, %s156
      %s158 = sphi 0, %s156
      %s159 = sphi 0, %s158
      %s173 = sphi 0, %s159
      %s179 = sphi 0, %s181
      %s182 = sphi 0, %s179
      %s183 = sphi 0, %s182
      %s199 = sphi 0, %s183
    $region4: #{tpu_custom_call.1} parent=1 // loop_header_branch
      %20 = sbr.rel (%p18) target = $region8
    $region5: #{tpu_custom_call.1} parent=1 // loop_body
      %s22 = ssub.s32 %s17, 1
      %s23 = ssub.s32 %s17, 2
      %s24 = sadd.s32 %s17, 1
      %s25 = ssub.s32 %s17, %s24
      %p26 = scmp.eq.s32.totalorder %s25, 0
      %s28 = sadd.s32 %s27, 1
      %s29 = scalar_select %p26, %s27, %s28
      %p32 = pneg %p26
      %p33 = scmp.eq.s32.totalorder %s17, 1
      %p34 = por %p32, %p33
      %p35 = scmp.ne.s32.totalorder %s27, %s30
      %p36 = scmp.eq.s32.totalorder %s17, 0
      %p37 = por %p35, %p36
      %p38 = scmp.ne.s32.totalorder %s27, %s30
      %p39 = scmp.eq.s32.totalorder %s22, 1
      %p40 = por %p38, %p39
      %p41 = scmp.ne.s32.totalorder %s30, %s31
      %p42 = scmp.eq.s32.totalorder %s22, 0
      %p43 = por %p41, %p42
      %p44 = scmp.ne.s32.totalorder %s30, %s31
      %p45 = scmp.eq.s32.totalorder %s23, 1
      %p46 = por %p44, %p45
      %p48 = scmp.ne.s32.totalorder %s31, %s47
      %p49 = scmp.eq.s32.totalorder %s23, 0
      %p50 = por %p48, %p49
      %s52 = sadd.s32 %s51, 1
      %p55 = scmp.eq.s32.totalorder %s17, 1
      %p56 = scmp.ne.s32.totalorder %s51, %s53
      %p57 = scmp.eq.s32.totalorder %s17, 0
      %p58 = por %p56, %p57
      %p59 = scmp.ne.s32.totalorder %s51, %s53
      %p60 = scmp.eq.s32.totalorder %s22, 1
      %p61 = por %p59, %p60
      %p62 = scmp.ne.s32.totalorder %s53, %s54
      %p63 = scmp.eq.s32.totalorder %s22, 0
      %p64 = por %p62, %p63
      %p65 = scmp.ne.s32.totalorder %s53, %s54
      %p66 = scmp.eq.s32.totalorder %s23, 1
      %p67 = por %p65, %p66
      %p69 = scmp.ne.s32.totalorder %s54, %s68
      %p70 = scmp.eq.s32.totalorder %s23, 0
      %p71 = por %p69, %p70
      %s73 = sadd.s32 %s72, 1
      %p76 = scmp.eq.s32.totalorder %s17, 1
      %p77 = scmp.ne.s32.totalorder %s72, %s74
      %p78 = scmp.eq.s32.totalorder %s17, 0
      %p79 = por %p77, %p78
      %p80 = scmp.ne.s32.totalorder %s72, %s74
      %p81 = scmp.eq.s32.totalorder %s22, 1
      %p82 = por %p80, %p81
      %p83 = scmp.ne.s32.totalorder %s74, %s75
      %p84 = scmp.eq.s32.totalorder %s22, 0
      %p85 = por %p83, %p84
      %p86 = scmp.ne.s32.totalorder %s74, %s75
      %p87 = scmp.eq.s32.totalorder %s23, 1
      %p88 = por %p86, %p87
      %p90 = scmp.ne.s32.totalorder %s75, %s89
      %p91 = scmp.eq.s32.totalorder %s23, 0
      %p92 = por %p90, %p91
      %s94 = sadd.s32 %s93, 1
      %p97 = scmp.eq.s32.totalorder %s17, 1
      %p98 = scmp.ne.s32.totalorder %s93, %s95
      %p99 = scmp.eq.s32.totalorder %s17, 0
      %p100 = por %p98, %p99
      %p101 = scmp.ne.s32.totalorder %s93, %s95
      %p102 = scmp.eq.s32.totalorder %s22, 1
      %p103 = por %p101, %p102
      %p104 = scmp.ne.s32.totalorder %s95, %s96
      %p105 = scmp.eq.s32.totalorder %s22, 0
      %p106 = por %p104, %p105
      %p107 = scmp.ne.s32.totalorder %s95, %s96
      %p108 = scmp.eq.s32.totalorder %s23, 1
      %p109 = por %p107, %p108
      %p111 = scmp.ne.s32.totalorder %s96, %s110
      %p112 = scmp.eq.s32.totalorder %s23, 0
      %p113 = por %p111, %p112
      %s115 = sadd.s32 %s114, 1
      %p118 = scmp.eq.s32.totalorder %s17, 1
      %p119 = scmp.ne.s32.totalorder %s114, %s116
      %p120 = scmp.eq.s32.totalorder %s17, 0
      %p121 = por %p119, %p120
      %p122 = scmp.ne.s32.totalorder %s114, %s116
      %p123 = scmp.eq.s32.totalorder %s22, 1
      %p124 = por %p122, %p123
      %p125 = scmp.ne.s32.totalorder %s116, %s117
      %p126 = scmp.eq.s32.totalorder %s22, 0
      %p127 = por %p125, %p126
      %p128 = scmp.ne.s32.totalorder %s116, %s117
      %p129 = scmp.eq.s32.totalorder %s23, 1
      %p130 = por %p128, %p129
      %p132 = scmp.ne.s32.totalorder %s117, %s131
      %p133 = scmp.eq.s32.totalorder %s23, 0
      %p134 = por %p132, %p133
      %s136 = sadd.s32 %s135, 1
      %p139 = scmp.eq.s32.totalorder %s17, 1
      %p140 = scmp.ne.s32.totalorder %s135, %s137
      %p141 = scmp.eq.s32.totalorder %s17, 0
      %p142 = por %p140, %p141
      %p143 = scmp.ne.s32.totalorder %s135, %s137
      %p144 = scmp.eq.s32.totalorder %s22, 1
      %p145 = por %p143, %p144
      %p146 = scmp.ne.s32.totalorder %s137, %s138
      %p147 = scmp.eq.s32.totalorder %s22, 0
      %p148 = por %p146, %p147
      %p149 = scmp.ne.s32.totalorder %s137, %s138
      %p150 = scmp.eq.s32.totalorder %s23, 1
      %p151 = por %p149, %p150
      %p153 = scmp.ne.s32.totalorder %s138, %s152
      %p154 = scmp.eq.s32.totalorder %s23, 0
      %p155 = por %p153, %p154
      %s157 = sadd.s32 %s156, 1
      %p160 = scmp.eq.s32.totalorder %s17, 1
      %p161 = scmp.ne.s32.totalorder %s156, %s158
      %p162 = scmp.eq.s32.totalorder %s17, 0
      %p163 = por %p161, %p162
      %p164 = scmp.ne.s32.totalorder %s156, %s158
      %p165 = scmp.eq.s32.totalorder %s22, 1
      %p166 = por %p164, %p165
      %p167 = scmp.ne.s32.totalorder %s158, %s159
      %p168 = scmp.eq.s32.totalorder %s22, 0
      %p169 = por %p167, %p168
      %p170 = scmp.ne.s32.totalorder %s158, %s159
      %p171 = scmp.eq.s32.totalorder %s23, 1
      %p172 = por %p170, %p171
      %p174 = scmp.ne.s32.totalorder %s159, %s173
      %p175 = scmp.eq.s32.totalorder %s23, 0
      %p176 = por %p174, %p175
      %s177 = ssub.s32 %s17, %s24
      %p178 = scmp.eq.s32.totalorder %s177, 0
      %s180 = sadd.s32 %s179, 1
      %s181 = scalar_select %p178, %s179, %s180
      %p184 = pneg %p178
      %p185 = scmp.eq.s32.totalorder %s17, 1
      %p186 = por %p184, %p185
      %p187 = scmp.ne.s32.totalorder %s179, %s182
      %p188 = scmp.eq.s32.totalorder %s17, 0
      %p189 = por %p187, %p188
      %p190 = scmp.ne.s32.totalorder %s179, %s182
      %p191 = scmp.eq.s32.totalorder %s22, 1
      %p192 = por %p190, %p191
      %p193 = scmp.ne.s32.totalorder %s182, %s183
      %p194 = scmp.eq.s32.totalorder %s22, 0
      %p195 = por %p193, %p194
      %p196 = scmp.ne.s32.totalorder %s182, %s183
      %p197 = scmp.eq.s32.totalorder %s23, 1
      %p198 = por %p196, %p197
      %p200 = scmp.ne.s32.totalorder %s183, %s199
      %p201 = scmp.eq.s32.totalorder %s23, 0
      %p202 = por %p200, %p201
      %p203 = scmp.le.s32.totalorder 1, %s17
      %p204 = scmp.lt.s32.totalorder %s17, 3
      %p205 = pnand %p203, %p204
      %p206 = pneg %p205
      // Predicated region
      $region9: #{tpu_custom_call.1} parent=5 // pred_check
        _
      $region10: #{tpu_custom_call.1} parent=5 // pred_check_branch
        %208 = sbr.rel (%p205) target = $region12
      $region11: #{tpu_custom_call.1} parent=5 // pred_region
        %s209 = ssub.s32 %s17, 1
        // Predicated region
        $region13: #{tpu_custom_call.1} parent=11 // pred_check
          %p210 = pneg %p64
        $region14: #{tpu_custom_call.1} parent=11 // pred_check_branch
          %212 = sbr.rel (%p210) target = $region16
        $region15: #{tpu_custom_call.1} parent=11 // pred_region
          _
        $region16: #{tpu_custom_call.1} parent=11 // pred_fallthru
          _
        // Predicated region
        $region17: #{tpu_custom_call.1} parent=11 // pred_check
          %p213 = pneg %p85
        $region18: #{tpu_custom_call.1} parent=11 // pred_check_branch
          %215 = sbr.rel (%p213) target = $region20
        $region19: #{tpu_custom_call.1} parent=11 // pred_region
          _
        $region20: #{tpu_custom_call.1} parent=11 // pred_fallthru
          _
        // Predicated region
        $region21: #{tpu_custom_call.1} parent=11 // pred_check
          %p216 = pneg %p106
        $region22: #{tpu_custom_call.1} parent=11 // pred_check_branch
          %218 = sbr.rel (%p216) target = $region24
        $region23: #{tpu_custom_call.1} parent=11 // pred_region
          _
        $region24: #{tpu_custom_call.1} parent=11 // pred_fallthru
          _
        // Predicated region
        $region25: #{tpu_custom_call.1} parent=11 // pred_check
          %p219 = pneg %p127
        $region26: #{tpu_custom_call.1} parent=11 // pred_check_branch
          %221 = sbr.rel (%p219) target = $region28
        $region27: #{tpu_custom_call.1} parent=11 // pred_region
          _
        $region28: #{tpu_custom_call.1} parent=11 // pred_fallthru
          _
        // Predicated region
        $region29: #{tpu_custom_call.1} parent=11 // pred_check
          %p222 = pneg %p148
        $region30: #{tpu_custom_call.1} parent=11 // pred_check_branch
          %224 = sbr.rel (%p222) target = $region32
        $region31: #{tpu_custom_call.1} parent=11 // pred_region
          _
        $region32: #{tpu_custom_call.1} parent=11 // pred_fallthru
          _
        // Predicated region
        $region33: #{tpu_custom_call.1} parent=11 // pred_check
          %p225 = pneg %p169
        $region34: #{tpu_custom_call.1} parent=11 // pred_check_branch
          %227 = sbr.rel (%p225) target = $region36
        $region35: #{tpu_custom_call.1} parent=11 // pred_region
          _
        $region36: #{tpu_custom_call.1} parent=11 // pred_fallthru
          _
      $region12: #{tpu_custom_call.1} parent=5 // pred_fallthru
        _
      %p228 = scmp.lt.s32.totalorder %s17, 2
      // Predicated region
      $region37: #{tpu_custom_call.1} parent=5 // pred_check
        %p229 = pneg %p228
      $region38: #{tpu_custom_call.1} parent=5 // pred_check_branch
        %231 = sbr.rel (%p229) target = $region40
      $region39: #{tpu_custom_call.1} parent=5 // pred_region
        // Predicated region
        $region41: #{tpu_custom_call.1} parent=39 // pred_check
          %p232 = pneg %p37
        $region42: #{tpu_custom_call.1} parent=39 // pred_check_branch
          %234 = sbr.rel (%p232) target = $region44
        $region43: #{tpu_custom_call.1} parent=39 // pred_region
          %s235 = smul.u32 16, %s17
          %p236 = scmp.lt.s32.totalorder %s235, 31
          %s237 = scalar_select %p236, %s235, 31
          %s238 = smul.addr %s237, 8
          %s239 = scalar_lea.vmem %s0, %s238
          %s240 = smul.u32 16, %s17
        $region44: #{tpu_custom_call.1} parent=39 // pred_fallthru
          _
      $region40: #{tpu_custom_call.1} parent=5 // pred_fallthru
        _
      %p241 = scmp.le.s32.totalorder 1, %s17
      %p242 = scmp.lt.s32.totalorder %s17, 3
      %p243 = pnand %p241, %p242
      %p244 = pneg %p243
      // Predicated region
      $region45: #{tpu_custom_call.1} parent=5 // pred_check
        _
      $region46: #{tpu_custom_call.1} parent=5 // pred_check_branch
        %246 = sbr.rel (%p243) target = $region48
      $region47: #{tpu_custom_call.1} parent=5 // pred_region
        %s247 = ssub.s32 %s17, 1
        %s248 = smul.u32 16, %s22
        %p249 = scmp.lt.s32.totalorder %s248, 31
        %s250 = scalar_select %p249, %s248, 31
        %s251 = smul.addr %s250, 8
        %s252 = scalar_lea.vmem %s0, %s251
        %p253 = pneg %p43
        %p254 = pneg %p40
        %p255 = pneg %p64
        %p256 = pneg %p61
        %p257 = pneg %p85
        %p258 = pneg %p82
        %p259 = pneg %p106
        %p260 = pneg %p103
        %p261 = pneg %p127
        %p262 = pneg %p124
        %p263 = pneg %p148
        %p264 = pneg %p145
        %p265 = pneg %p169
        %p266 = pneg %p166
        %p267 = pneg %p195
        %p268 = pneg %p192
        %s269 = sand.u32 %s182, 1
        %s270 = scalar_lea.sflag [#allocation4], %s269
        %s271 = sand.u32 %s182, 1
        %s272 = smul.addr %s271, 128
        %s273 = scalar_lea.vmem [#allocation3], %s272
        %s274 = smul.u32 16, %s22
        %p275 = scmp.lt.s32.totalorder %s274, 31
        %s276 = scalar_select %p275, %s274, 31
        %s277 = smul.addr %s276, 8
        %s278 = scalar_lea.vmem %s0, %s277
        %s279 = smul.u32 16, %s22
        %s280 = smul.u32 16, %s22
        %v282 = vld [vmem:[%s278] sm:$0xff]
        %v283 = vld [vmem:[%s278 + $0x8] sm:$0xff]
        %v284 = vld [vmem:[%s278 + $0x10] sm:$0xff]
        %v285 = vld [vmem:[%s278 + $0x18] sm:$0xff]
        %v286 = vld [vmem:[%s278 + $0x20] sm:$0xff]
        %v287 = vld [vmem:[%s278 + $0x28] sm:$0xff]
        %v288 = vld [vmem:[%s278 + $0x30] sm:$0xff]
        %v289 = vld [vmem:[%s278 + $0x38] sm:$0xff]
        %v290 = vld [vmem:[%s278 + $0x40] sm:$0xff]
        %v291 = vld [vmem:[%s278 + $0x48] sm:$0xff]
        %v292 = vld [vmem:[%s278 + $0x50] sm:$0xff]
        %v293 = vld [vmem:[%s278 + $0x58] sm:$0xff]
        %v294 = vld [vmem:[%s278 + $0x60] sm:$0xff]
        %v295 = vld [vmem:[%s278 + $0x68] sm:$0xff]
        %v296 = vld [vmem:[%s278 + $0x70] sm:$0xff]
        %v297 = vld [vmem:[%s278 + $0x78] sm:$0xff]
        %v298 = vpack.c.bf16 %v283, %v282
        %v299 = vpack.c.bf16 %v285, %v284
        %v300 = vpack.c.bf16 %v287, %v286
        %v301 = vpack.c.bf16 %v289, %v288
        %v302 = vpack.c.bf16 %v291, %v290
        %v303 = vpack.c.bf16 %v293, %v292
        %v304 = vpack.c.bf16 %v295, %v294
        %v305 = vpack.c.bf16 %v297, %v296
        %v306 = vld [vmem:[%s1] sm:$0xf]
        %v307 = vld [vmem:[%s1 + $0x4] sm:$0xf]
        %v308 = vld [vmem:[%s1 + $0x8] sm:$0xf]
        %v309 = vld [vmem:[%s1 + $0xc] sm:$0xf]
        %v310 = vld [vmem:[%s1 + $0x10] sm:$0xf]
        %v311 = vld [vmem:[%s1 + $0x14] sm:$0xf]
        %v312 = vld [vmem:[%s2] sm:$0x1]
        %v314 = vlaneseq
        %v315 = vshrl.u32 %v314, 7
        %v316 = vsub.s32 0, %v315
        %v317 = vrot.slane %v312, %v316
        %v325 = vunpack.c.l.b16 %v306
        %v326 = vunpack.c.l.b16 %v307
        %v327 = vunpack.c.l.b16 %v308
        %v328 = vunpack.c.l.b16 %v309
        %v329 = vunpack.c.l.b16 %v310
        %v330 = vunpack.c.l.b16 %v311
        %v331 = vpack.c.b16 %v326, %v325
        %v332 = vpack.c.b16 %v328, %v327
        %v333 = vpack.c.b16 %v330, %v329
        %vm337 = vcmask 392192
        %v339 = vsel %vm337, %v298, 0
        %v342 = vsel %vm337, %v299, 0
        %v345 = vsel %vm337, %v300, 0
        %v348 = vsel %vm337, %v301, 0
        %v351 = vsel %vm337, %v302, 0
        %v354 = vsel %vm337, %v303, 0
        %v357 = vsel %vm337, %v304, 0
        %v360 = vsel %vm337, %v305, 0
        %362 = vmatprep.subr.bf16.mxu0 0
        %363 = vmatpush1.bf16.msra.mxu0 %v331
        %364 = vmatprep.subr.bf16.mxu0 0
        %365 = vmatpush1.bf16.msra.mxu0 %v332
        %366 = vmatprep.subr.bf16.mxu0 0
        %367 = vmatpush1.bf16.msra.mxu0 %v333
        %368 = vmatprep.subr.bf16.mxu0 0
        %369 = vmatpush1.bf16.msra.mxu0 0
        %370 = vmatprep.subr.bf16.mxu0 0
        %371 = vmatpush1.bf16.msra.mxu0 0
        %372 = vmatprep.subr.bf16.mxu0 0
        %373 = vmatpush1.bf16.msra.mxu0 0
        %374 = vmatprep.subr.bf16.mxu0 0
        %375 = vmatpush1.bf16.msra.mxu0 0
        %376 = vmatprep.subr.bf16.mxu0 0
        %377 = vmatpush1.bf16.msra.mxu0 0
        %378 = vmatprep.subr.bf16.mxu0 0
        %379 = vmatpush1.bf16.msra.mxu0 0
        %380 = vmatprep.subr.bf16.mxu0 0
        %381 = vmatpush1.bf16.msra.mxu0 0
        %382 = vmatprep.subr.bf16.mxu0 0
        %383 = vmatpush1.bf16.msra.mxu0 0
        %384 = vmatprep.subr.bf16.mxu0 0
        %385 = vmatpush1.bf16.msra.mxu0 0
        %386 = vmatprep.subr.bf16.mxu0 0
        %387 = vmatpush1.bf16.msra.mxu0 0
        %388 = vmatprep.subr.bf16.mxu0 0
        %389 = vmatpush1.bf16.msra.mxu0 0
        %390 = vmatprep.subr.bf16.mxu0 0
        %391 = vmatpush1.bf16.msra.mxu0 0
        %392 = vmatprep.subr.bf16.mxu0 0
        %393 = vmatpush1.bf16.msra.mxu0 0
        %394 = vmatprep.mubr.bf16.mxu0 0
        %395 = vmatmul.mubr.bf16.gmra.mrb[0].mxu0 %v339
        %v396 = vpop.f32.mrb[0].mxu0
        %v397 = vadd.f32 %v317, %v396
        %v398 = vpop.f32.mrb[0].mxu0
        %v399 = vpop.f32.mrb[0].mxu0
        %v400 = vadd.f32 %v317, %v399
        %v401 = vpop.f32.mrb[0].mxu0
        %402 = vmatprep.mubr.bf16.mxu0 0
        %403 = vmatmul.mubr.bf16.gmra.mrb[0].mxu0 %v342
        %v404 = vpop.f32.mrb[0].mxu0
        %v405 = vadd.f32 %v317, %v404
        %v406 = vpop.f32.mrb[0].mxu0
        %v407 = vpop.f32.mrb[0].mxu0
        %v408 = vadd.f32 %v317, %v407
        %v409 = vpop.f32.mrb[0].mxu0
        %410 = vmatprep.mubr.bf16.mxu0 0
        %411 = vmatmul.mubr.bf16.gmra.mrb[0].mxu0 %v345
        %v412 = vpop.f32.mrb[0].mxu0
        %v413 = vadd.f32 %v317, %v412
        %v414 = vpop.f32.mrb[0].mxu0
        %v415 = vpop.f32.mrb[0].mxu0
        %v416 = vadd.f32 %v317, %v415
        %v417 = vpop.f32.mrb[0].mxu0
        %418 = vmatprep.mubr.bf16.mxu0 0
        %419 = vmatmul.mubr.bf16.gmra.mrb[0].mxu0 %v348
        %v420 = vpop.f32.mrb[0].mxu0
        %v421 = vadd.f32 %v317, %v420
        %v422 = vpop.f32.mrb[0].mxu0
        %v423 = vpop.f32.mrb[0].mxu0
        %v424 = vadd.f32 %v317, %v423
        %v425 = vpop.f32.mrb[0].mxu0
        %426 = vmatprep.mubr.bf16.mxu0 0
        %427 = vmatmul.mubr.bf16.gmra.mrb[0].mxu0 %v351
        %v428 = vpop.f32.mrb[0].mxu0
        %v429 = vadd.f32 %v317, %v428
        %v430 = vpop.f32.mrb[0].mxu0
        %v431 = vpop.f32.mrb[0].mxu0
        %v432 = vadd.f32 %v317, %v431
        %v433 = vpop.f32.mrb[0].mxu0
        %434 = vmatprep.mubr.bf16.mxu0 0
        %435 = vmatmul.mubr.bf16.gmra.mrb[0].mxu0 %v354
        %v436 = vpop.f32.mrb[0].mxu0
        %v437 = vadd.f32 %v317, %v436
        %v438 = vpop.f32.mrb[0].mxu0
        %v439 = vpop.f32.mrb[0].mxu0
        %v440 = vadd.f32 %v317, %v439
        %v441 = vpop.f32.mrb[0].mxu0
        %442 = vmatprep.mubr.bf16.mxu0 0
        %443 = vmatmul.mubr.bf16.gmra.mrb[0].mxu0 %v357
        %v444 = vpop.f32.mrb[0].mxu0
        %v445 = vadd.f32 %v317, %v444
        %v446 = vpop.f32.mrb[0].mxu0
        %v447 = vpop.f32.mrb[0].mxu0
        %v448 = vadd.f32 %v317, %v447
        %v449 = vpop.f32.mrb[0].mxu0
        %450 = vmatprep.mubr.bf16.mxu0 0
        %451 = vmatmul.mubr.bf16.gmra.mrb[0].mxu0 %v360
        %v452 = vpop.f32.mrb[0].mxu0
        %v453 = vadd.f32 %v317, %v452
        %v454 = vpop.f32.mrb[0].mxu0
        %v455 = vpop.f32.mrb[0].mxu0
        %v456 = vadd.f32 %v317, %v455
        %v457 = vpop.f32.mrb[0].mxu0
        %458 = vdwg.mxu0
        %v459 = vmul.f32 %v397, 0.2
        %v460 = vmul.f32 %v400, 0.2
        %v461 = vmul.f32 %v405, 0.2
        %v462 = vmul.f32 %v408, 0.2
        %v463 = vmul.f32 %v413, 0.2
        %v464 = vmul.f32 %v416, 0.2
        %v465 = vmul.f32 %v421, 0.2
        %v466 = vmul.f32 %v424, 0.2
        %v467 = vmul.f32 %v429, 0.2
        %v468 = vmul.f32 %v432, 0.2
        %v469 = vmul.f32 %v437, 0.2
        %v470 = vmul.f32 %v440, 0.2
        %v471 = vmul.f32 %v445, 0.2
        %v472 = vmul.f32 %v448, 0.2
        %v473 = vmul.f32 %v453, 0.2
        %v474 = vmul.f32 %v456, 0.2
        %v475 = vmax.f32 %v397, %v459
        %v476 = vmax.f32 %v400, %v460
        %v477 = vmax.f32 %v405, %v461
        %v478 = vmax.f32 %v408, %v462
        %v479 = vmax.f32 %v413, %v463
        %v480 = vmax.f32 %v416, %v464
        %v481 = vmax.f32 %v421, %v465
        %v482 = vmax.f32 %v424, %v466
        %v483 = vmax.f32 %v429, %v467
        %v484 = vmax.f32 %v432, %v468
        %v485 = vmax.f32 %v437, %v469
        %v486 = vmax.f32 %v440, %v470
        %v487 = vmax.f32 %v445, %v471
        %v488 = vmax.f32 %v448, %v472
        %v489 = vmax.f32 %v453, %v473
        %v490 = vmax.f32 %v456, %v474
        %v491 = vpack.c.bf16 %v476, %v475
        %v492 = vpack.c.bf16 %v478, %v477
        %v493 = vpack.c.bf16 %v480, %v479
        %v494 = vpack.c.bf16 %v482, %v481
        %v495 = vpack.c.bf16 %v484, %v483
        %v496 = vpack.c.bf16 %v486, %v485
        %v497 = vpack.c.bf16 %v488, %v487
        %v498 = vpack.c.bf16 %v490, %v489
        %v499 = vld [vmem:[%s3] sm:$0xf]
        %v500 = vld [vmem:[%s3 + $0x4] sm:$0xf]
        %v501 = vld [vmem:[%s3 + $0x8] sm:$0xf]
        %v502 = vld [vmem:[%s3 + $0xc] sm:$0xf]
        %v503 = vld [vmem:[%s3 + $0x10] sm:$0xf]
        %v504 = vld [vmem:[%s3 + $0x14] sm:$0xf]
        %v505 = vld [vmem:[%s3 + $0x18] sm:$0xf]
        %v506 = vld [vmem:[%s3 + $0x1c] sm:$0xf]
        %v507 = vld [vmem:[%s3 + $0x20] sm:$0xf]
        %v508 = vld [vmem:[%s3 + $0x24] sm:$0xf]
        %v509 = vld [vmem:[%s3 + $0x28] sm:$0xf]
        %v510 = vld [vmem:[%s3 + $0x2c] sm:$0xf]
        %v511 = vld [vmem:[%s3 + $0x30] sm:$0xf]
        %v512 = vld [vmem:[%s3 + $0x34] sm:$0xf]
        %v513 = vld [vmem:[%s3 + $0x38] sm:$0xf]
        %v514 = vld [vmem:[%s3 + $0x3c] sm:$0xf]
        %v515 = vld [vmem:[%s4] sm:$0x1]
        %v517 = vlaneseq
        %v518 = vshrl.u32 %v517, 7
        %v519 = vsub.s32 0, %v518
        %v520 = vrot.slane %v515, %v519
        %v538 = vunpack.c.l.b16 %v499
        %v539 = vunpack.c.l.b16 %v500
        %v540 = vunpack.c.l.b16 %v501
        %v541 = vunpack.c.l.b16 %v502
        %v542 = vunpack.c.l.b16 %v503
        %v543 = vunpack.c.l.b16 %v504
        %v544 = vunpack.c.l.b16 %v505
        %v545 = vunpack.c.l.b16 %v506
        %v546 = vunpack.c.l.b16 %v507
        %v547 = vunpack.c.l.b16 %v508
        %v548 = vunpack.c.l.b16 %v509
        %v549 = vunpack.c.l.b16 %v510
        %v550 = vunpack.c.l.b16 %v511
        %v551 = vunpack.c.l.b16 %v512
        %v552 = vunpack.c.l.b16 %v513
        %v553 = vunpack.c.l.b16 %v514
        %v554 = vpack.c.b16 %v539, %v538
        %v555 = vpack.c.b16 %v541, %v540
        %v556 = vpack.c.b16 %v543, %v542
        %v557 = vpack.c.b16 %v545, %v544
        %v558 = vpack.c.b16 %v547, %v546
        %v559 = vpack.c.b16 %v549, %v548
        %v560 = vpack.c.b16 %v551, %v550
        %v561 = vpack.c.b16 %v553, %v552
        %570 = vmatprep.subr.bf16.mxu0 0
        %571 = vmatpush1.bf16.msra.mxu0 %v554
        %572 = vmatprep.subr.bf16.mxu0 0
        %573 = vmatpush1.bf16.msra.mxu0 %v555
        %574 = vmatprep.subr.bf16.mxu0 0
        %575 = vmatpush1.bf16.msra.mxu0 %v556
        %576 = vmatprep.subr.bf16.mxu0 0
        %577 = vmatpush1.bf16.msra.mxu0 %v557
        %578 = vmatprep.subr.bf16.mxu0 0
        %579 = vmatpush1.bf16.msra.mxu0 %v558
        %580 = vmatprep.subr.bf16.mxu0 0
        %581 = vmatpush1.bf16.msra.mxu0 %v559
        %582 = vmatprep.subr.bf16.mxu0 0
        %583 = vmatpush1.bf16.msra.mxu0 %v560
        %584 = vmatprep.subr.bf16.mxu0 0
        %585 = vmatpush1.bf16.msra.mxu0 %v561
        %586 = vmatprep.subr.bf16.mxu0 0
        %587 = vmatpush1.bf16.msra.mxu0 0
        %588 = vmatprep.subr.bf16.mxu0 0
        %589 = vmatpush1.bf16.msra.mxu0 0
        %590 = vmatprep.subr.bf16.mxu0 0
        %591 = vmatpush1.bf16.msra.mxu0 0
        %592 = vmatprep.subr.bf16.mxu0 0
        %593 = vmatpush1.bf16.msra.mxu0 0
        %594 = vmatprep.subr.bf16.mxu0 0
        %595 = vmatpush1.bf16.msra.mxu0 0
        %596 = vmatprep.subr.bf16.mxu0 0
        %597 = vmatpush1.bf16.msra.mxu0 0
        %598 = vmatprep.subr.bf16.mxu0 0
        %599 = vmatpush1.bf16.msra.mxu0 0
        %600 = vmatprep.subr.bf16.mxu0 0
        %601 = vmatpush1.bf16.msra.mxu0 0
        %602 = vmatprep.mubr.bf16.mxu0 0
        %603 = vmatmul.mubr.bf16.gmra.mrb[0].mxu0 %v491
        %v604 = vpop.f32.mrb[0].mxu0
        %v605 = vadd.f32 %v520, %v604
        %v606 = vpop.f32.mrb[0].mxu0
        %v607 = vpop.f32.mrb[0].mxu0
        %v608 = vadd.f32 %v520, %v607
        %v609 = vpop.f32.mrb[0].mxu0
        %610 = vmatprep.mubr.bf16.mxu0 0
        %611 = vmatmul.mubr.bf16.gmra.mrb[0].mxu0 %v492
        %v612 = vpop.f32.mrb[0].mxu0
        %v613 = vadd.f32 %v520, %v612
        %v614 = vpop.f32.mrb[0].mxu0
        %v615 = vpop.f32.mrb[0].mxu0
        %v616 = vadd.f32 %v520, %v615
        %v617 = vpop.f32.mrb[0].mxu0
        %618 = vmatprep.mubr.bf16.mxu0 0
        %619 = vmatmul.mubr.bf16.gmra.mrb[0].mxu0 %v493
        %v620 = vpop.f32.mrb[0].mxu0
        %v621 = vadd.f32 %v520, %v620
        %v622 = vpop.f32.mrb[0].mxu0
        %v623 = vpop.f32.mrb[0].mxu0
        %v624 = vadd.f32 %v520, %v623
        %v625 = vpop.f32.mrb[0].mxu0
        %626 = vmatprep.mubr.bf16.mxu0 0
        %627 = vmatmul.mubr.bf16.gmra.mrb[0].mxu0 %v494
        %v628 = vpop.f32.mrb[0].mxu0
        %v629 = vadd.f32 %v520, %v628
        %v630 = vpop.f32.mrb[0].mxu0
        %v631 = vpop.f32.mrb[0].mxu0
        %v632 = vadd.f32 %v520, %v631
        %v633 = vpop.f32.mrb[0].mxu0
        %634 = vmatprep.mubr.bf16.mxu0 0
        %635 = vmatmul.mubr.bf16.gmra.mrb[0].mxu0 %v495
        %v636 = vpop.f32.mrb[0].mxu0
        %v637 = vadd.f32 %v520, %v636
        %v638 = vpop.f32.mrb[0].mxu0
        %v639 = vpop.f32.mrb[0].mxu0
        %v640 = vadd.f32 %v520, %v639
        %v641 = vpop.f32.mrb[0].mxu0
        %642 = vmatprep.mubr.bf16.mxu0 0
        %643 = vmatmul.mubr.bf16.gmra.mrb[0].mxu0 %v496
        %v644 = vpop.f32.mrb[0].mxu0
        %v645 = vadd.f32 %v520, %v644
        %v646 = vpop.f32.mrb[0].mxu0
        %v647 = vpop.f32.mrb[0].mxu0
        %v648 = vadd.f32 %v520, %v647
        %v649 = vpop.f32.mrb[0].mxu0
        %650 = vmatprep.mubr.bf16.mxu0 0
        %651 = vmatmul.mubr.bf16.gmra.mrb[0].mxu0 %v497
        %v652 = vpop.f32.mrb[0].mxu0
        %v653 = vadd.f32 %v520, %v652
        %v654 = vpop.f32.mrb[0].mxu0
        %v655 = vpop.f32.mrb[0].mxu0
        %v656 = vadd.f32 %v520, %v655
        %v657 = vpop.f32.mrb[0].mxu0
        %658 = vmatprep.mubr.bf16.mxu0 0
        %659 = vmatmul.mubr.bf16.gmra.mrb[0].mxu0 %v498
        %v660 = vpop.f32.mrb[0].mxu0
        %v661 = vadd.f32 %v520, %v660
        %v662 = vpop.f32.mrb[0].mxu0
        %v663 = vpop.f32.mrb[0].mxu0
        %v664 = vadd.f32 %v520, %v663
        %v665 = vpop.f32.mrb[0].mxu0
        %666 = vdwg.mxu0
        %v667 = vmul.f32 %v605, 0.2
        %v668 = vmul.f32 %v608, 0.2
        %v669 = vmul.f32 %v613, 0.2
        %v670 = vmul.f32 %v616, 0.2
        %v671 = vmul.f32 %v621, 0.2
        %v672 = vmul.f32 %v624, 0.2
        %v673 = vmul.f32 %v629, 0.2
        %v674 = vmul.f32 %v632, 0.2
        %v675 = vmul.f32 %v637, 0.2
        %v676 = vmul.f32 %v640, 0.2
        %v677 = vmul.f32 %v645, 0.2
        %v678 = vmul.f32 %v648, 0.2
        %v679 = vmul.f32 %v653, 0.2
        %v680 = vmul.f32 %v656, 0.2
        %v681 = vmul.f32 %v661, 0.2
        %v682 = vmul.f32 %v664, 0.2
        %v683 = vmax.f32 %v605, %v667
        %v684 = vmax.f32 %v608, %v668
        %v685 = vmax.f32 %v613, %v669
        %v686 = vmax.f32 %v616, %v670
        %v687 = vmax.f32 %v621, %v671
        %v688 = vmax.f32 %v624, %v672
        %v689 = vmax.f32 %v629, %v673
        %v690 = vmax.f32 %v632, %v674
        %v691 = vmax.f32 %v637, %v675
        %v692 = vmax.f32 %v640, %v676
        %v693 = vmax.f32 %v645, %v677
        %v694 = vmax.f32 %v648, %v678
        %v695 = vmax.f32 %v653, %v679
        %v696 = vmax.f32 %v656, %v680
        %v697 = vmax.f32 %v661, %v681
        %v698 = vmax.f32 %v664, %v682
        %v699 = vpack.c.bf16 %v684, %v683
        %v700 = vpack.c.bf16 %v686, %v685
        %v701 = vpack.c.bf16 %v688, %v687
        %v702 = vpack.c.bf16 %v690, %v689
        %v703 = vpack.c.bf16 %v692, %v691
        %v704 = vpack.c.bf16 %v694, %v693
        %v705 = vpack.c.bf16 %v696, %v695
        %v706 = vpack.c.bf16 %v698, %v697
        %v707 = vld [vmem:[%s5] sm:$0xf]
        %v708 = vld [vmem:[%s5 + $0x4] sm:$0xf]
        %v709 = vld [vmem:[%s5 + $0x8] sm:$0xf]
        %v710 = vld [vmem:[%s5 + $0xc] sm:$0xf]
        %v711 = vld [vmem:[%s5 + $0x10] sm:$0xf]
        %v712 = vld [vmem:[%s5 + $0x14] sm:$0xf]
        %v713 = vld [vmem:[%s5 + $0x18] sm:$0xf]
        %v714 = vld [vmem:[%s5 + $0x1c] sm:$0xf]
        %v715 = vld [vmem:[%s5 + $0x20] sm:$0xf]
        %v716 = vld [vmem:[%s5 + $0x24] sm:$0xf]
        %v717 = vld [vmem:[%s5 + $0x28] sm:$0xf]
        %v718 = vld [vmem:[%s5 + $0x2c] sm:$0xf]
        %v719 = vld [vmem:[%s5 + $0x30] sm:$0xf]
        %v720 = vld [vmem:[%s5 + $0x34] sm:$0xf]
        %v721 = vld [vmem:[%s5 + $0x38] sm:$0xf]
        %v722 = vld [vmem:[%s5 + $0x3c] sm:$0xf]
        %s723 = sld [smem:[#allocation2]]
        %v724 = vstv %s723
        %v741 = vunpack.c.l.b16 %v707
        %v742 = vunpack.c.l.b16 %v708
        %v743 = vunpack.c.l.b16 %v709
        %v744 = vunpack.c.l.b16 %v710
        %v745 = vunpack.c.l.b16 %v711
        %v746 = vunpack.c.l.b16 %v712
        %v747 = vunpack.c.l.b16 %v713
        %v748 = vunpack.c.l.b16 %v714
        %v749 = vunpack.c.l.b16 %v715
        %v750 = vunpack.c.l.b16 %v716
        %v751 = vunpack.c.l.b16 %v717
        %v752 = vunpack.c.l.b16 %v718
        %v753 = vunpack.c.l.b16 %v719
        %v754 = vunpack.c.l.b16 %v720
        %v755 = vunpack.c.l.b16 %v721
        %v756 = vunpack.c.l.b16 %v722
        %v757 = vpack.c.b16 %v742, %v741
        %v758 = vpack.c.b16 %v744, %v743
        %v759 = vpack.c.b16 %v746, %v745
        %v760 = vpack.c.b16 %v748, %v747
        %v761 = vpack.c.b16 %v750, %v749
        %v762 = vpack.c.b16 %v752, %v751
        %v763 = vpack.c.b16 %v754, %v753
        %v764 = vpack.c.b16 %v756, %v755
        %773 = vmatprep.subr.bf16.mxu0 0
        %774 = vmatpush1.bf16.msra.mxu0 %v757
        %775 = vmatprep.subr.bf16.mxu0 0
        %776 = vmatpush1.bf16.msra.mxu0 %v758
        %777 = vmatprep.subr.bf16.mxu0 0
        %778 = vmatpush1.bf16.msra.mxu0 %v759
        %779 = vmatprep.subr.bf16.mxu0 0
        %780 = vmatpush1.bf16.msra.mxu0 %v760
        %781 = vmatprep.subr.bf16.mxu0 0
        %782 = vmatpush1.bf16.msra.mxu0 %v761
        %783 = vmatprep.subr.bf16.mxu0 0
        %784 = vmatpush1.bf16.msra.mxu0 %v762
        %785 = vmatprep.subr.bf16.mxu0 0
        %786 = vmatpush1.bf16.msra.mxu0 %v763
        %787 = vmatprep.subr.bf16.mxu0 0
        %788 = vmatpush1.bf16.msra.mxu0 %v764
        %789 = vmatprep.subr.bf16.mxu0 0
        %790 = vmatpush1.bf16.msra.mxu0 0
        %791 = vmatprep.subr.bf16.mxu0 0
        %792 = vmatpush1.bf16.msra.mxu0 0
        %793 = vmatprep.subr.bf16.mxu0 0
        %794 = vmatpush1.bf16.msra.mxu0 0
        %795 = vmatprep.subr.bf16.mxu0 0
        %796 = vmatpush1.bf16.msra.mxu0 0
        %797 = vmatprep.subr.bf16.mxu0 0
        %798 = vmatpush1.bf16.msra.mxu0 0
        %799 = vmatprep.subr.bf16.mxu0 0
        %800 = vmatpush1.bf16.msra.mxu0 0
        %801 = vmatprep.subr.bf16.mxu0 0
        %802 = vmatpush1.bf16.msra.mxu0 0
        %803 = vmatprep.subr.bf16.mxu0 0
        %804 = vmatpush1.bf16.msra.mxu0 0
        %805 = vmatprep.mubr.bf16.mxu0 0
        %806 = vmatmul.mubr.bf16.gmra.mrb[0].mxu0 %v699
        %v807 = vpop.f32.mrb[0].mxu0
        %v808 = vadd.f32 %v724, %v807
        %v809 = vpop.f32.mrb[0].mxu0
        %v810 = vpop.f32.mrb[0].mxu0
        %v811 = vadd.f32 %v724, %v810
        %v812 = vpop.f32.mrb[0].mxu0
        %813 = vmatprep.mubr.bf16.mxu0 0
        %814 = vmatmul.mubr.bf16.gmra.mrb[0].mxu0 %v700
        %v815 = vpop.f32.mrb[0].mxu0
        %v816 = vadd.f32 %v724, %v815
        %v817 = vpop.f32.mrb[0].mxu0
        %v818 = vpop.f32.mrb[0].mxu0
        %v819 = vadd.f32 %v724, %v818
        %v820 = vpop.f32.mrb[0].mxu0
        %821 = vmatprep.mubr.bf16.mxu0 0
        %822 = vmatmul.mubr.bf16.gmra.mrb[0].mxu0 %v701
        %v823 = vpop.f32.mrb[0].mxu0
        %v824 = vadd.f32 %v724, %v823
        %v825 = vpop.f32.mrb[0].mxu0
        %v826 = vpop.f32.mrb[0].mxu0
        %v827 = vadd.f32 %v724, %v826
        %v828 = vpop.f32.mrb[0].mxu0
        %829 = vmatprep.mubr.bf16.mxu0 0
        %830 = vmatmul.mubr.bf16.gmra.mrb[0].mxu0 %v702
        %v831 = vpop.f32.mrb[0].mxu0
        %v832 = vadd.f32 %v724, %v831
        %v833 = vpop.f32.mrb[0].mxu0
        %v834 = vpop.f32.mrb[0].mxu0
        %v835 = vadd.f32 %v724, %v834
        %v836 = vpop.f32.mrb[0].mxu0
        %837 = vmatprep.mubr.bf16.mxu0 0
        %838 = vmatmul.mubr.bf16.gmra.mrb[0].mxu0 %v703
        %v839 = vpop.f32.mrb[0].mxu0
        %v840 = vadd.f32 %v724, %v839
        %v841 = vpop.f32.mrb[0].mxu0
        %v842 = vpop.f32.mrb[0].mxu0
        %v843 = vadd.f32 %v724, %v842
        %v844 = vpop.f32.mrb[0].mxu0
        %845 = vmatprep.mubr.bf16.mxu0 0
        %846 = vmatmul.mubr.bf16.gmra.mrb[0].mxu0 %v704
        %v847 = vpop.f32.mrb[0].mxu0
        %v848 = vadd.f32 %v724, %v847
        %v849 = vpop.f32.mrb[0].mxu0
        %v850 = vpop.f32.mrb[0].mxu0
        %v851 = vadd.f32 %v724, %v850
        %v852 = vpop.f32.mrb[0].mxu0
        %853 = vmatprep.mubr.bf16.mxu0 0
        %854 = vmatmul.mubr.bf16.gmra.mrb[0].mxu0 %v705
        %v855 = vpop.f32.mrb[0].mxu0
        %v856 = vadd.f32 %v724, %v855
        %v857 = vpop.f32.mrb[0].mxu0
        %v858 = vpop.f32.mrb[0].mxu0
        %v859 = vadd.f32 %v724, %v858
        %v860 = vpop.f32.mrb[0].mxu0
        %861 = vmatprep.mubr.bf16.mxu0 0
        %862 = vmatmul.mubr.bf16.gmra.mrb[0].mxu0 %v706
        %v863 = vpop.f32.mrb[0].mxu0
        %v864 = vadd.f32 %v724, %v863
        %v865 = vpop.f32.mrb[0].mxu0
        %v866 = vpop.f32.mrb[0].mxu0
        %v867 = vadd.f32 %v724, %v866
        %v868 = vpop.f32.mrb[0].mxu0
        %869 = vdwg.mxu0
        %870 = vst [vmem:[%s273] sm:$0xff] %v808
        %871 = vst [vmem:[%s273 + $0x8] sm:$0xff] %v811
        %872 = vst [vmem:[%s273 + $0x10] sm:$0xff] %v816
        %873 = vst [vmem:[%s273 + $0x18] sm:$0xff] %v819
        %874 = vst [vmem:[%s273 + $0x20] sm:$0xff] %v824
        %875 = vst [vmem:[%s273 + $0x28] sm:$0xff] %v827
        %876 = vst [vmem:[%s273 + $0x30] sm:$0xff] %v832
        %877 = vst [vmem:[%s273 + $0x38] sm:$0xff] %v835
        %878 = vst [vmem:[%s273 + $0x40] sm:$0xff] %v840
        %879 = vst [vmem:[%s273 + $0x48] sm:$0xff] %v843
        %880 = vst [vmem:[%s273 + $0x50] sm:$0xff] %v848
        %881 = vst [vmem:[%s273 + $0x58] sm:$0xff] %v851
        %882 = vst [vmem:[%s273 + $0x60] sm:$0xff] %v856
        %883 = vst [vmem:[%s273 + $0x68] sm:$0xff] %v859
        %884 = vst [vmem:[%s273 + $0x70] sm:$0xff] %v864
        %885 = vst [vmem:[%s273 + $0x78] sm:$0xff] %v867
        %s886 = sand.u32 %s182, 1
        %s887 = scalar_lea.sflag [#allocation4], %s886
        %s888 = sand.u32 %s182, 1
        %s889 = smul.addr %s888, 128
        %s890 = scalar_lea.vmem [#allocation3], %s889
        // Predicated region
        $region49: #{tpu_custom_call.1} parent=47 // pred_check
          %p891 = pneg %p192
        $region50: #{tpu_custom_call.1} parent=47 // pred_check_branch
          %893 = sbr.rel (%p891) target = $region52
        $region51: #{tpu_custom_call.1} parent=47 // pred_region
          %s894 = smul.u32 16, %s22
          %s896 = ssub.s32 2048, 2048
          %897 = vsyncadd %s887, %s896
          %s898 = smul.addr %s894, 128
          %s899 = scalar_lea.hbm %s7, %s898
          %s900 = sshll.u32 %s890, 4
          %s901 = int_to_ptr.vmem [resolvable:$true] %s900
          %906 = dma.vmem_to_hbm [thread:$0]  %s901, 2048, %s899, %s887, 128, 128, 8
        $region52: #{tpu_custom_call.1} parent=47 // pred_fallthru
          _
      $region48: #{tpu_custom_call.1} parent=5 // pred_fallthru
        _
      %p907 = scmp.le.s32.totalorder 2, %s17
      // Predicated region
      $region53: #{tpu_custom_call.1} parent=5 // pred_check
        %p908 = pneg %p907
      $region54: #{tpu_custom_call.1} parent=5 // pred_check_branch
        %910 = sbr.rel (%p908) target = $region56
      $region55: #{tpu_custom_call.1} parent=5 // pred_region
        %s911 = ssub.s32 %s17, 2
        // Predicated region
        $region57: #{tpu_custom_call.1} parent=55 // pred_check
          %p912 = pneg %p198
        $region58: #{tpu_custom_call.1} parent=55 // pred_check_branch
          %914 = sbr.rel (%p912) target = $region60
        $region59: #{tpu_custom_call.1} parent=55 // pred_region
          %s915 = sand.u32 %s183, 1
          %s916 = scalar_lea.sflag [#allocation4], %s915
          %s917 = sand.u32 %s183, 1
          %s918 = smul.addr %s917, 128
          %s919 = scalar_lea.vmem [#allocation3], %s918
          %920 = dma.done %s916, 2048
        $region60: #{tpu_custom_call.1} parent=55 // pred_fallthru
          _
      $region56: #{tpu_custom_call.1} parent=5 // pred_fallthru
        _
    $region6: #{tpu_custom_call.1} parent=1 // loop_footer
      %s21 = sadd.s32 1, %s17
    $region7: #{tpu_custom_call.1} parent=1 // loop_footer_branch
      %16 = sbr.rel target = $region3
    $region8: #{tpu_custom_call.1} parent=1 // loop_exit
      _
    %921 = vsyncpa [#allocation4], 1
    %s922 = scalar_lea.sflag [#allocation4], 1
    %923 = vsyncpa %s922, 1

</llo_original>
